<compile_context>
chip_gen: v5e
topology: v5e:2x2
jax: 0.10.0
libtpu: 0.0.40
codegen_flags: <defaults>
</compile_context>

<pallas_src>
import functools
import math

import jax
import jax.numpy as jnp
import numpy as np
from jax.experimental import pallas as pl
from jax.experimental.pallas import tpu as pltpu


def _focal_kernel(pred_ref, tgt_ref, out_ref, *, gamma, fold_w):
    """One (row-tile, flat-tile) step of the focal-loss reduction.

    pred_ref / tgt_ref : (tb, tflat) lane-dense flat input tile
    out_ref            : (tb, fold_w) fp32 running accumulator (resident across
                         the flat/anchor grid axis)
    """
    a = pl.program_id(1)  # flat-tile (reduction) axis — innermost

    @pl.when(a == 0)
    def _():
        out_ref[...] = jnp.zeros_like(out_ref)

    # torch.clamp(pred, -20, 20) / torch.clamp(target, 0, 1)
    x = jnp.clip(pred_ref[...].astype(jnp.float32), -20.0, 20.0)
    t = jnp.clip(tgt_ref[...].astype(jnp.float32), 0.0, 1.0)

    # Numerically-stable BCE-with-logits, reduction='none'.
    ce = jnp.maximum(x, 0.0) - x * t + jnp.log1p(jnp.exp(-jnp.abs(x)))

    p_t = jnp.exp(-ce)
    w = 1.0 - p_t
    if gamma == 2.0:                                # default: square, no EUP pow
        fw = w * w
    elif gamma == 1.0:
        fw = w
    elif gamma == 0.0:
        fw = jnp.ones_like(w)
    elif float(gamma) == int(gamma) and gamma > 0:  # small integer exponent
        fw = w
        for _ in range(int(gamma) - 1):
            fw = fw * w
    else:                                           # generic pow: clamp base
        # (forward-only; clamp to eps if a VJP is ever added)
        fw = jnp.maximum(w, 0.0) ** gamma

    focal = fw * ce * 0.5

    # Fold the (tb, tflat) tile down to (tb, fold_w) with a tree of tile-aligned
    # 128-lane-chunk adds (no relayout), then accumulate into the output block.
    nchunks = focal.shape[1] // fold_w
    chunks = [focal[:, j * fold_w:(j + 1) * fold_w] for j in range(nchunks)]
    while len(chunks) > 1:
        nxt = [chunks[i] + chunks[i + 1] for i in range(0, len(chunks) - 1, 2)]
        if len(chunks) % 2:
            nxt.append(chunks[-1])
        chunks = nxt

    out_ref[...] += chunks[0]


def _vmem_capacity_bytes():
    """Physical VMEM per TensorCore (v5e/v6e: 128 MiB, v7x: 64 MiB)."""
    try:
        cap = getattr(pltpu.get_tpu_info(), "vmem_capacity_bytes", None)
        if cap:
            return int(cap)
    except Exception:
        pass
    return 64 << 20  # conservative default (smallest current generation)


def _round_up(x, m):
    return ((x + m - 1) // m) * m


def focal_loss(predictions, targets, alpha=None, gamma=2.0, reduction="mean",
               max_flat_tile=None):
    """JAX/Pallas equivalent of FocalLoss.forward.

    Inputs may be f32 or bf16 (kept at their dtype for the HBM->VMEM DMA; the
    kernel computes in f32).  `max_flat_tile` (elements) is a test hook to
    force a smaller flat tile / multi-step reduction.
    """
    predictions = jnp.asarray(predictions)
    targets = jnp.asarray(targets)
    B, A, C = predictions.shape
    assert targets.shape == (B, A, C), "predictions/targets shape mismatch"

    # Lane-dense fold width: smallest multiple of 128 lanes that holds whole
    # anchors, so per-class sums can be recovered by a reshape in the wrapper.
    fold_w = (C * 128) // math.gcd(C, 128)          # lcm(C, 128)
    anchors_per_fold = fold_w // C

    # ---- Row packing: fold anchor groups into the sublane axis for small B so
    # vregs use all 8 sublanes and the parallel row-tile axis has >= 2 steps.
    if B < 16:
        g = max(1, min(16 // B, A // anchors_per_fold if anchors_per_fold else 1))
    else:
        g = 1
    A_pad = _round_up(A, g)
    R = B * g                                       # packed rows
    F = (A_pad // g) * C                            # flat width per packed row

    if R >= 8:
        R_pad = _round_up(R, 8)
        tb = 8
    else:
        R_pad = R                                   # block == full dim: allowed
        tb = R

    # ---- Flat-axis tile width against the per-generation VMEM budget.
    vmem_cap = _vmem_capacity_bytes()
    vmem_limit = int(0.85 * vmem_cap)               # headroom for Mosaic internals
    in_bytes = predictions.dtype.itemsize + targets.dtype.itemsize
    tile_budget = vmem_limit // 2                   # rest: out block, pipeline, etc.
    folds_fit = max(1, tile_budget // (tb * fold_w * in_bytes * 2))  # 2 = dbl-buffer
    folds_needed = pl.cdiv(F, fold_w)
    folds_per_tile = int(min(folds_fit, folds_needed))
    if max_flat_tile is not None:
        folds_per_tile = max(1, min(folds_per_tile, max_flat_tile // fold_w))
    tflat = folds_per_tile * fold_w
    n_flat_tiles = pl.cdiv(F, tflat)
    F_pad = n_flat_tiles * tflat

    # ---- Padding: predictions -> -20, targets -> 0, so padded elements
    # contribute ~exp(-20)-scaled values (numerically zero), never 0.5*log(2).
    def _prep(x, pad_val):
        if A_pad != A:
            x = jnp.pad(x, ((0, 0), (0, A_pad - A), (0, 0)),
                        constant_values=pad_val)
        x = x.reshape(R, F)
        if R_pad != R or F_pad != F:
            x = jnp.pad(x, ((0, R_pad - R), (0, F_pad - F)),
                        constant_values=pad_val)
        return x

    pred2d = _prep(predictions, -20.0)
    tgt2d = _prep(targets, 0.0)

    kernel = functools.partial(_focal_kernel, gamma=float(gamma), fold_w=fold_w)

    partial_sums = pl.pallas_call(
        kernel,
        out_shape=jax.ShapeDtypeStruct((R_pad, fold_w), jnp.float32),
        grid_spec=pltpu.PrefetchScalarGridSpec(
            num_scalar_prefetch=0,
            grid=(R_pad // tb, n_flat_tiles),
            in_specs=[
                pl.BlockSpec((tb, tflat), lambda r, a: (r, a)),
                pl.BlockSpec((tb, tflat), lambda r, a: (r, a)),
            ],
            out_specs=pl.BlockSpec((tb, fold_w), lambda r, a: (r, 0)),
        ),
        compiler_params=pltpu.CompilerParams(
            dimension_semantics=("parallel", "arbitrary"),
            vmem_limit_bytes=vmem_limit,
        ),
    )(pred2d, tgt2d)

    # ---- Tiny plain-JAX glue: per-class sums per packed row, drop pad rows,
    # re-merge anchor groups per batch, drop the 4 box columns, mean over
    # anchors, alpha scaling, final scalar reduction.
    per_rc = partial_sums.reshape(R_pad, anchors_per_fold, C).sum(axis=1)
    per_bc = per_rc[:R].reshape(B, g, C).sum(axis=1)[:, 4:] * (1.0 / A)
    if alpha is not None:
        per_bc = per_bc * jnp.asarray(alpha)
    return jnp.mean(per_bc) if reduction == "mean" else jnp.sum(per_bc)


def _focal_loss_ref(predictions, targets, alpha=None, gamma=2.0, reduction="mean"):
    """Pure-JAX reference mirroring the PyTorch module."""
    x = jnp.clip(predictions[..., 4:].astype(jnp.float32), -20.0, 20.0)
    t = jnp.clip(targets[..., 4:].astype(jnp.float32), 0.0, 1.0)
    ce = jnp.maximum(x, 0.0) - x * t + jnp.log1p(jnp.exp(-jnp.abs(x)))
    p_t = jnp.exp(-ce)
    focal = ((1.0 - p_t) ** gamma) * ce * 0.5
    focal = jnp.mean(focal, axis=1)
    if alpha is not None:
        focal = focal * jnp.asarray(alpha)
    return jnp.mean(focal) if reduction == "mean" else jnp.sum(focal)


if __name__ == "__main__":
    key = jax.random.PRNGKey(0)
    k1, k2, k3, k4, k5 = jax.random.split(key, 5)

    NUM_CLS = 8
    C = 4 + NUM_CLS

    # Case 1: B=2, A=64 — small single-tile path, default gamma=2, mean.
    B, A = 2, 64
    preds = 5.0 * jax.random.normal(k1, (B, A, C), dtype=jnp.float32)
    tgts = jax.random.uniform(k2, (B, A, C), dtype=jnp.float32,
                              minval=-0.5, maxval=1.5)   # exercise the clamp
    out = jax.block_until_ready(focal_loss(preds, tgts))
    ref = _focal_loss_ref(preds, tgts)
    np.testing.assert_allclose(np.asarray(out), np.asarray(ref),
                               rtol=1e-5, atol=1e-6)

    # Case 2: B=2, A=1024 — row packing to 16 rows (2 parallel row tiles),
    # multi-step anchor reduction (forced 2 flat tiles), alpha, sum reduction.
    A2 = 1024
    preds2 = 5.0 * jax.random.normal(k3, (B, A2, C), dtype=jnp.float32)
    tgts2 = jax.random.uniform(k4, (B, A2, C), dtype=jnp.float32,
                               minval=-0.5, maxval=1.5)
    alpha = jax.random.uniform(k5, (NUM_CLS,), dtype=jnp.float32)
    out2 = jax.block_until_ready(
        focal_loss(preds2, tgts2, alpha=alpha, gamma=2.0, reduction="sum",
                   max_flat_tile=768))
    ref2 = _focal_loss_ref(preds2, tgts2, alpha=alpha, gamma=2.0,
                           reduction="sum")
    np.testing.assert_allclose(np.asarray(out2), np.asarray(ref2),
                               rtol=1e-5, atol=1e-4)

    # Case 3: bf16 inputs, B=3, A=100 — anchor/row/flat padding paths and a
    # non-integer gamma (generic clamped-pow path).
    B3, A3 = 3, 100
    preds3 = (5.0 * jax.random.normal(k1, (B3, A3, C), dtype=jnp.float32)
              ).astype(jnp.bfloat16)
    tgts3 = jax.random.uniform(k2, (B3, A3, C), dtype=jnp.float32,
                               minval=-0.5, maxval=1.5).astype(jnp.bfloat16)
    out3 = jax.block_until_ready(focal_loss(preds3, tgts3, gamma=1.5))
    ref3 = _focal_loss_ref(preds3, tgts3, gamma=1.5)
    np.testing.assert_allclose(np.asarray(out3), np.asarray(ref3),
                               rtol=1e-4, atol=1e-5)

    print("KERNEL_OK")
</pallas_src>

<mosaic_0001>
module attributes {stable_mosaic.version = 11 : i64} {
  func.func @_focal_kernel(%arg0: i32, %arg1: i32, %arg2: memref<4x384xf32, #tpu.memory_space<vmem>>, %arg3: memref<4x384xf32, #tpu.memory_space<vmem>>, %arg4: memref<4x384xf32, #tpu.memory_space<vmem>>) attributes {dimension_semantics = [#tpu.dimension_semantics<parallel>, #tpu.dimension_semantics<arbitrary>], iteration_bounds = array<i64: 1, 1>, scalar_prefetch = 0 : i64, scratch_operands = 0 : i64, tpu.core_type = #tpu.core_type<tc>, window_params = [{transform_indices = @transform_0, window_bounds = array<i64: 4, 384>}, {transform_indices = @transform_1, window_bounds = array<i64: 4, 384>}, {transform_indices = @transform_2, window_bounds = array<i64: 4, 384>}]} {
    %c0_i32 = arith.constant 0 : i32
    %0 = arith.cmpi eq, %arg1, %c0_i32 : i32
    %1 = arith.extui %0 : i1 to i32
    %c0_i32_0 = arith.constant 0 : i32
    %2 = arith.cmpi ne, %1, %c0_i32_0 : i32
    scf.if %2 {
      %cst_16 = arith.constant 0.000000e+00 : f32
      %35 = vector.broadcast %cst_16 : f32 to vector<4x384xf32>
      %c0_17 = arith.constant 0 : index
      %c0_18 = arith.constant 0 : index
      %36 = vector.load %arg4[%c0_17, %c0_18] : memref<4x384xf32, #tpu.memory_space<vmem>>, vector<4x384xf32>
      tpu.vector_store %arg4[%c0_17, %c0_18], %35 {strides = array<i32>} : memref<4x384xf32, #tpu.memory_space<vmem>>, vector<4x384xf32>,
    } else {
    }
    %c0 = arith.constant 0 : index
    %c0_1 = arith.constant 0 : index
    %3 = vector.load %arg2[%c0, %c0_1] : memref<4x384xf32, #tpu.memory_space<vmem>>, vector<4x384xf32>
    %cst = arith.constant -2.000000e+01 : f32
    %cst_2 = arith.constant 2.000000e+01 : f32
    %4 = vector.broadcast %cst : f32 to vector<4x384xf32>
    %5 = arith.maximumf %4, %3 : vector<4x384xf32>
    %6 = vector.broadcast %cst_2 : f32 to vector<4x384xf32>
    %7 = arith.minimumf %6, %5 : vector<4x384xf32>
    %c0_3 = arith.constant 0 : index
    %c0_4 = arith.constant 0 : index
    %8 = vector.load %arg3[%c0_3, %c0_4] : memref<4x384xf32, #tpu.memory_space<vmem>>, vector<4x384xf32>
    %cst_5 = arith.constant 0.000000e+00 : f32
    %cst_6 = arith.constant 1.000000e+00 : f32
    %9 = vector.broadcast %cst_5 : f32 to vector<4x384xf32>
    %10 = arith.maximumf %9, %8 : vector<4x384xf32>
    %11 = vector.broadcast %cst_6 : f32 to vector<4x384xf32>
    %12 = arith.minimumf %11, %10 : vector<4x384xf32>
    %cst_7 = arith.constant 0.000000e+00 : f32
    %13 = vector.broadcast %cst_7 : f32 to vector<4x384xf32>
    %14 = arith.maximumf %7, %13 : vector<4x384xf32>
    %15 = arith.mulf %7, %12 : vector<4x384xf32>
    %16 = arith.subf %14, %15 : vector<4x384xf32>
    %17 = math.absf %7 : vector<4x384xf32>
    %cst_8 = arith.constant 0.000000e+00 : f32
    %18 = vector.broadcast %cst_8 : f32 to vector<4x384xf32>
    %19 = arith.subf %18, %17 : vector<4x384xf32>
    %20 = math.exp %19 : vector<4x384xf32>
    %21 = math.log1p %20 : vector<4x384xf32>
    %22 = arith.addf %16, %21 : vector<4x384xf32>
    %cst_9 = arith.constant 0.000000e+00 : f32
    %23 = vector.broadcast %cst_9 : f32 to vector<4x384xf32>
    %24 = arith.subf %23, %22 : vector<4x384xf32>
    %25 = math.exp %24 : vector<4x384xf32>
    %cst_10 = arith.constant 1.000000e+00 : f32
    %26 = vector.broadcast %cst_10 : f32 to vector<4x384xf32>
    %27 = arith.subf %26, %25 : vector<4x384xf32>
    %28 = arith.mulf %27, %27 : vector<4x384xf32>
    %29 = arith.mulf %28, %22 : vector<4x384xf32>
    %cst_11 = arith.constant 5.000000e-01 : f32
    %30 = vector.broadcast %cst_11 : f32 to vector<4x384xf32>
    %31 = arith.mulf %29, %30 : vector<4x384xf32>
    %c0_12 = arith.constant 0 : index
    %c0_13 = arith.constant 0 : index
    %32 = vector.load %arg4[%c0_12, %c0_13] : memref<4x384xf32, #tpu.memory_space<vmem>>, vector<4x384xf32>
    %33 = arith.addf %32, %31 : vector<4x384xf32>
    %c0_14 = arith.constant 0 : index
    %c0_15 = arith.constant 0 : index
    %34 = vector.load %arg4[%c0_14, %c0_15] : memref<4x384xf32, #tpu.memory_space<vmem>>, vector<4x384xf32>
    tpu.vector_store %arg4[%c0_14, %c0_15], %33 {strides = array<i32>} : memref<4x384xf32, #tpu.memory_space<vmem>>, vector<4x384xf32>,
    return
  }
  func.func @transform_0(%arg0: i32, %arg1: i32) -> (i32, i32) {
    %c0_i32 = arith.constant 0 : i32
    return %arg0, %arg1 : i32, i32
  }
  func.func @transform_1(%arg0: i32, %arg1: i32) -> (i32, i32) {
    %c0_i32 = arith.constant 0 : i32
    return %arg0, %arg1 : i32, i32
  }
  func.func @transform_2(%arg0: i32, %arg1: i32) -> (i32, i32) {
    %c0_i32 = arith.constant 0 : i32
    %c0_i32_0 = arith.constant 0 : i32
    return %arg0, %c0_i32 : i32, i32
  }
}

</mosaic_0001>

<llo_original>
// kernel: tpu_custom_call.1
$region0: #{tpu_custom_call.1}
  #allocation0 [shape = 'u32[]', space=smem, size = 0x4, offset = 0x4, fixed_abs, tag = 'smem constant byte address 0x4 - core index']
  #allocation1 [shape = 'u32[72,128]{1,0:T(1,128)}', space=vmem, size = 0x9000, scoped, tag = 'internal scratch']
  %s0 = inlined_call_operand.hbm [shape: f32[4,384], index: 0, kind: input, shape index: {}]
  %s1 = inlined_call_operand.hbm [shape: f32[4,384], index: 1, kind: input, shape index: {}]
  %s2 = inlined_call_operand.hbm [shape: f32[4,384], index: 2, kind: output, shape index: {}]
  %s3 = sld [smem:[#allocation0]]
  $region30: #{tpu_custom_call.1} parent=0
    _
  %s5 = ssub.s32 1, %s3
  %s6 = scalar_select 0, %s5, %s3
  $region1: #{tpu_custom_call.1} parent=0
    #allocation2 [shape = 'u8[6144]{0}', space=vmem, size = 0x1800, scoped, tag = 'input window, operand 0, single buffered']
    #allocation3 [shape = 's32[1]{0}', space=sflag, size = 0x4, scoped, tag = 'scoped memory for tpu_custom_call.1']
    #allocation4 [shape = 's32[1]{0}', space=sflag, size = 0x4, scoped, tag = 'scoped memory for tpu_custom_call.1']
    #allocation5 [shape = 'u8[6144]{0}', space=vmem, size = 0x1800, scoped, tag = 'input window, operand 1, single buffered']
    #allocation6 [shape = 's32[1]{0}', space=sflag, size = 0x4, scoped, tag = 'scoped memory for tpu_custom_call.1']
    #allocation7 [shape = 'u8[6144]{0}', space=vmem, size = 0x1800, scoped, tag = 'output window, operand 0, single buffered']
    %7 = vsyncpa [#allocation3], 0
    %8 = vsyncpa [#allocation6], 0
    %9 = vsyncpa [#allocation4], 0
    // Predicated region
    $region2: #{tpu_custom_call.1} parent=1 // pred_check
      _
    $region3: #{tpu_custom_call.1} parent=1 // pred_check_branch
      %11 = sbr.rel (0) target = $region5
    $region4: #{tpu_custom_call.1} parent=1 // pred_region
      %13 = vsyncadd [#allocation3], 0
      %s15 = sshll.u32 %s0, 4
      %s16 = int_to_ptr.hbm [resolvable:$true] %s15
      %s17 = sshll.u32 [#allocation2], 4
      %s18 = int_to_ptr.vmem [resolvable:$true] %s17
      %20 = dma.hbm_to_vmem [thread:$0]  %s16, 192, %s18, [#allocation3]
    $region5: #{tpu_custom_call.1} parent=1 // pred_fallthru
      _
    // Predicated region
    $region6: #{tpu_custom_call.1} parent=1 // pred_check
      _
    $region7: #{tpu_custom_call.1} parent=1 // pred_check_branch
      %22 = sbr.rel (0) target = $region9
    $region8: #{tpu_custom_call.1} parent=1 // pred_region
      %24 = vsyncadd [#allocation6], 0
      %s26 = sshll.u32 %s1, 4
      %s27 = int_to_ptr.hbm [resolvable:$true] %s26
      %s28 = sshll.u32 [#allocation5], 4
      %s29 = int_to_ptr.vmem [resolvable:$true] %s28
      %31 = dma.hbm_to_vmem [thread:$0]  %s27, 192, %s29, [#allocation6]
    $region9: #{tpu_custom_call.1} parent=1 // pred_fallthru
      _
    // Predicated region
    $region10: #{tpu_custom_call.1} parent=1 // pred_check
      _
    $region11: #{tpu_custom_call.1} parent=1 // pred_check_branch
      %33 = sbr.rel (0) target = $region13
    $region12: #{tpu_custom_call.1} parent=1 // pred_region
      %35 = dma.done [#allocation3], 192
    $region13: #{tpu_custom_call.1} parent=1 // pred_fallthru
      _
    // Predicated region
    $region14: #{tpu_custom_call.1} parent=1 // pred_check
      _
    $region15: #{tpu_custom_call.1} parent=1 // pred_check_branch
      %37 = sbr.rel (0) target = $region17
    $region16: #{tpu_custom_call.1} parent=1 // pred_region
      %39 = dma.done [#allocation6], 192
    $region17: #{tpu_custom_call.1} parent=1 // pred_fallthru
      _
    %p40 = scmp.eq.s32.totalorder 0, 0
    // Predicated region
    $region18: #{tpu_custom_call.1} parent=1 // pred_check
      %p41 = pneg %p40
    $region19: #{tpu_custom_call.1} parent=1 // pred_check_branch
      %43 = sbr.rel (%p41) target = $region21
    $region20: #{tpu_custom_call.1} parent=1 // pred_region
      %44 = vst [vmem:[#allocation7] sm:$0xff] 0.0
      %45 = vst [vmem:[#allocation7 + $0x8] sm:$0xf] 0.0
    $region21: #{tpu_custom_call.1} parent=1 // pred_fallthru
      _
    %v46 = vld [vmem:[#allocation2] sm:$0xff]
    %v47 = vld [vmem:[#allocation2 + $0x8] sm:$0xf]
    %v48 = vmax.f32 %v46, -20.0
    %v49 = vmax.f32 %v47, -20.0
    %v50 = vmin.f32 %v48, 20.0
    %v51 = vmin.f32 %v49, 20.0
    %v52 = vld [vmem:[#allocation5] sm:$0xff]
    %v53 = vld [vmem:[#allocation5 + $0x8] sm:$0xf]
    %v54 = vmax.f32 %v52, 0.0
    %v55 = vmax.f32 %v53, 0.0
    %v56 = vmin.f32 %v54, 1.0
    %v57 = vmin.f32 %v55, 1.0
    %v58 = vmax.f32 %v50, 0.0
    %v59 = vmax.f32 %v51, 0.0
    %v60 = vmul.f32 %v50, %v56
    %v61 = vmul.f32 %v51, %v57
    %v62 = vsub.f32 %v58, %v60
    %v63 = vsub.f32 %v59, %v61
    %v64 = vand.u32 2147483647, %v50
    %v65 = vand.u32 2147483647, %v51
    %v66 = vsub.f32 0.0, %v64
    %v67 = vsub.f32 0.0, %v65
    %v68 = vmul.f32 %v66, 1.442695
    %v69 = vpow.pop %v68
    %v70 = vmul.f32 %v67, 1.442695
    %v71 = vpow.pop %v70
    %v72 = vadd.f32 %v69, 1.0
    %v73 = vlog2.pop %v72
    %v74 = vmul.f32 %v73, 0.6931472
    %v75 = vmul.f32 -0.5, %v69
    %v76 = vadd.f32 %v75, 1.0
    %v77 = vmul.f32 %v76, %v69
    %v78 = vand.u32 2147483647, %v69
    %vm79 = vcmp.lt.f32.partialorder %v78, 0.0004427343
    %v80 = vsel %vm79, %v77, %v74
    %v81 = vadd.f32 %v71, 1.0
    %v82 = vlog2.pop %v81
    %v83 = vmul.f32 %v82, 0.6931472
    %v84 = vmul.f32 -0.5, %v71
    %v85 = vadd.f32 %v84, 1.0
    %v86 = vmul.f32 %v85, %v71
    %v87 = vand.u32 2147483647, %v71
    %vm88 = vcmp.lt.f32.partialorder %v87, 0.0004427343
    %v89 = vsel %vm88, %v86, %v83
    %v90 = vadd.f32 %v62, %v80
    %v91 = vadd.f32 %v63, %v89
    %v92 = vsub.f32 0.0, %v90
    %v93 = vsub.f32 0.0, %v91
    %v94 = vmul.f32 %v92, 1.442695
    %v95 = vpow.pop %v94
    %v96 = vmul.f32 %v93, 1.442695
    %v97 = vpow.pop %v96
    %v98 = vsub.f32 1.0, %v95
    %v99 = vsub.f32 1.0, %v97
    %v100 = vmul.f32 %v98, %v98
    %v101 = vmul.f32 %v99, %v99
    %v102 = vmul.f32 %v100, %v90
    %v103 = vmul.f32 %v101, %v91
    %v104 = vmul.f32 %v102, 0.5
    %v105 = vmul.f32 %v103, 0.5
    %v106 = vld [vmem:[#allocation7] sm:$0xff]
    %v107 = vld [vmem:[#allocation7 + $0x8] sm:$0xf]
    %v108 = vadd.f32 %v106, %v104
    %v109 = vadd.f32 %v107, %v105
    %110 = vst [vmem:[#allocation7] sm:$0xff] %v108
    %111 = vst [vmem:[#allocation7 + $0x8] sm:$0xf] %v109
    // Predicated region
    $region22: #{tpu_custom_call.1} parent=1 // pred_check
      _
    $region23: #{tpu_custom_call.1} parent=1 // pred_check_branch
      %113 = sbr.rel (0) target = $region25
    $region24: #{tpu_custom_call.1} parent=1 // pred_region
      %115 = vsyncadd [#allocation4], 0
      %s117 = sshll.u32 [#allocation7], 4
      %s118 = int_to_ptr.vmem [resolvable:$true] %s117
      %s119 = sshll.u32 %s2, 4
      %s120 = int_to_ptr.hbm [resolvable:$true] %s119
      %122 = dma.vmem_to_hbm [thread:$0]  %s118, 192, %s120, [#allocation4]
    $region25: #{tpu_custom_call.1} parent=1 // pred_fallthru
      _
    // Predicated region
    $region26: #{tpu_custom_call.1} parent=1 // pred_check
      _
    $region27: #{tpu_custom_call.1} parent=1 // pred_check_branch
      %124 = sbr.rel (0) target = $region29
    $region28: #{tpu_custom_call.1} parent=1 // pred_region
      %126 = dma.done [#allocation4], 192
    $region29: #{tpu_custom_call.1} parent=1 // pred_fallthru
      _
    %127 = vsyncpa [#allocation3], 1
    %128 = vsyncpa [#allocation6], 1
    %129 = vsyncpa [#allocation4], 1

</llo_original>
